<compile_context>
chip_gen: v7x
topology: tpu7x:2x2x1
jax: 0.10.0
libtpu: 0.0.40
codegen_flags: <defaults>
</compile_context>

<pallas_src>
import functools

import jax
import jax.numpy as jnp
from jax.experimental import pallas as pl
from jax.experimental.pallas import tpu as pltpu

_LANES = 128
_MAX_BLOCK_BYTES = 4 * 1024 * 1024    # per-input streaming block (f32: 8192 rows)
_CHUNK_R = 512                        # rows per fori_loop chunk inside a block
_UNROLL = 4
_VMEM_LIMIT_BYTES = 40 * 1024 * 1024  # 4 inputs x 2 bufs x <=4 MiB = 32 MiB + slack


def _cdiv(a, b):
    return -(-a // b)


def _stream_dtype(x):
    return x.dtype if jnp.issubdtype(x.dtype, jnp.floating) else jnp.float32


def _sublane_rows(dtype):
    # Minimum second-minor tile: 8 rows for 4-byte, 16 for 2-byte, 32 for 1-byte.
    return max(8, 32 // jnp.dtype(dtype).itemsize)


def _num_shards():
    """2 when the chip exposes two TensorCores to a single Pallas program."""
    try:
        kind = jax.devices()[0].device_kind.lower()
    except Exception:
        return 1
    return 2 if any(tag in kind for tag in ("v7", "v4", "v5p")) else 1


def _as_rows128(x, min_rows):
    """Flatten to (rows, 128) in a streamable float dtype.  Pads with zeros
    only when the element count is not a multiple of 128 or there are fewer
    than `min_rows` rows; 128-aligned inputs are a free reshape."""
    x = x.astype(_stream_dtype(x))
    flat = x.reshape(-1)
    n = flat.shape[0]
    rows = max(_cdiv(n, _LANES), min_rows)
    total = rows * _LANES
    if total != n:
        # TODO(synk): for huge 128-misaligned inputs this pad is a full copy;
        # a lane-masked tail block would avoid it.
        flat = jnp.pad(flat, (0, total - n))
    return flat.reshape(rows, _LANES), n


def _vdt_loss_kernel(d_ref, t_ref, Dp_ref, Tg_ref, out_ref, *,
                     block_r, chunk_r, unroll, blocks_per_shard,
                     rows_d, blocks_d, rows_D, blocks_D):
    """Accumulate masked-L1 partial sums into the resident output block.

    out_ref block (1, 4, 8, 128) f32 rows:
      [0] sum|d-t| partials  [1] count(t>0) partials
      [2] sum|D-T| partials  [3] count(T>0) partials
    """
    s = pl.program_id(0)
    j = pl.program_id(1)
    g = s * blocks_per_shard + j        # linear block index handled this step

    @pl.when(j == 0)
    def _():
        out_ref[...] = jnp.zeros_like(out_ref)

    n_chunks = block_r // chunk_r

    def block_sums(pred_ref, gt_ref, row_limit):
        # row_limit is None on the hot path (interior full block: no index
        # math at all) and a traced scalar valid-row count on the single
        # partial tail block per pair (rows DMA'd past the array end are
        # garbage and must be masked out).
        def body(i, carry):
            e_acc, c_acc = carry
            off = pl.multiple_of(i * chunk_r, chunk_r)
            p = pred_ref[pl.ds(off, chunk_r), :].astype(jnp.float32)
            q = gt_ref[pl.ds(off, chunk_r), :].astype(jnp.float32)
            valid = q > 0.0
            if row_limit is not None:
                rid = jax.lax.broadcasted_iota(
                    jnp.int32, (chunk_r, _LANES), 0) + off
                valid = jnp.logical_and(valid, rid < row_limit)
            err = jnp.where(valid, jnp.abs(p - q), 0.0)
            cnt = valid.astype(jnp.float32)
            # (chunk_r,128) -> (chunk_r//8, 8, 128) is layout-preserving;
            # summing the leading axis is pure VALU work (no XLU reduce).
            e_acc = e_acc + jnp.sum(
                err.reshape(chunk_r // 8, 8, _LANES), axis=0)
            c_acc = c_acc + jnp.sum(
                cnt.reshape(chunk_r // 8, 8, _LANES), axis=0)
            return e_acc, c_acc

        init = (jnp.zeros((8, _LANES), jnp.float32),
                jnp.zeros((8, _LANES), jnp.float32))
        return jax.lax.fori_loop(0, n_chunks, body, init,
                                 unroll=min(unroll, n_chunks))

    def accumulate_pair(pred_ref, gt_ref, err_row, cnt_row, rows_p, blocks_p):
        row0 = g * block_r

        # Hot path: interior (full) block -> mask is just gt > 0.
        @pl.when(row0 + block_r <= rows_p)
        def _():
            e, c = block_sums(pred_ref, gt_ref, None)
            out_ref[0, err_row] += e
            out_ref[0, cnt_row] += c

        # Cold path: the single partial tail block of this pair -> row mask.
        # Clamped / duplicated steps (g >= blocks_p) take neither path.
        @pl.when(jnp.logical_and(g < blocks_p, row0 + block_r > rows_p))
        def _():
            e, c = block_sums(pred_ref, gt_ref, rows_p - row0)
            out_ref[0, err_row] += e
            out_ref[0, cnt_row] += c

    accumulate_pair(d_ref, t_ref, 0, 1, rows_d, blocks_d)
    accumulate_pair(Dp_ref, Tg_ref, 2, 3, rows_D, blocks_D)


@jax.jit
def vdt_loss(l, r, d, D, t, T):
    """Pallas implementation of VDT_loss.forward (returns shape-(1,) f32).

    If a ground truth has no valid (>0) pixels the corresponding mean is nan,
    matching torch.mean over an empty selection.
    """
    # TODO(synk): the PyTorch module also handles t=None / T=None and the
    # .to('cuda') transfer; this kernel assumes both ground truths are present.
    del l, r  # unused by the reference loss

    stream_dts = [_stream_dtype(a) for a in (d, t, D, T)]
    row_align = max(_sublane_rows(dt) for dt in stream_dts)
    max_item = max(jnp.dtype(dt).itemsize for dt in stream_dts)

    d2, n_d = _as_rows128(d, row_align)
    t2, n_t = _as_rows128(t, row_align)
    D2, n_D = _as_rows128(D, row_align)
    T2, n_T = _as_rows128(T, row_align)
    assert n_d == n_t and n_D == n_T, "pred/gt shapes must match per pair"
    del n_t, n_T

    rows_d, rows_D = d2.shape[0], D2.shape[0]

    # Streaming block: as many rows as possible up to ~4 MiB per input, never
    # more rows than the smaller pair, aligned to the sublane tile and to the
    # in-kernel chunk size.
    max_block_r = max(_MAX_BLOCK_BYTES // (_LANES * max_item), row_align)
    block_r = min(max_block_r, (min(rows_d, rows_D) // row_align) * row_align)
    chunk_r = min(_CHUNK_R, block_r)
    block_r = (block_r // chunk_r) * chunk_r

    blocks_d = _cdiv(rows_d, block_r)
    blocks_D = _cdiv(rows_D, block_r)
    num_shards = _num_shards()
    blocks_per_shard = _cdiv(max(blocks_d, blocks_D), num_shards)

    def in_map(blocks_p):
        last = blocks_p - 1

        def index_map(s, j):
            # Clamp so DMAs of duplicated / shorter-pair steps stay in bounds;
            # the kernel's scalar pl.when gates skip their compute entirely.
            return (jnp.minimum(s * blocks_per_shard + j, last), 0)

        return index_map

    spec_d = pl.BlockSpec((block_r, _LANES), in_map(blocks_d))
    spec_D = pl.BlockSpec((block_r, _LANES), in_map(blocks_D))
    out_spec = pl.BlockSpec((1, 4, 8, _LANES), lambda s, j: (s, 0, 0, 0))

    kernel = functools.partial(
        _vdt_loss_kernel, block_r=block_r, chunk_r=chunk_r, unroll=_UNROLL,
        blocks_per_shard=blocks_per_shard,
        rows_d=rows_d, blocks_d=blocks_d, rows_D=rows_D, blocks_D=blocks_D)

    partials = pl.pallas_call(
        kernel,
        out_shape=jax.ShapeDtypeStruct((num_shards, 4, 8, _LANES),
                                       jnp.float32),
        grid_spec=pl.GridSpec(
            grid=(num_shards, blocks_per_shard),
            in_specs=[spec_d, spec_d, spec_D, spec_D],
            out_specs=out_spec,
        ),
        compiler_params=pltpu.CompilerParams(
            dimension_semantics=("parallel", "arbitrary"),
            vmem_limit_bytes=_VMEM_LIMIT_BYTES),
    )(d2, t2, D2, T2)

    # Tiny (shards,4,8,128) -> (4,) reduce and the two divides stay in XLA.
    sums = jnp.sum(partials, axis=(0, 2, 3))
    disparity_l1 = sums[0] / sums[1]
    depth_l1 = sums[2] / sums[3]
    return jnp.reshape(disparity_l1 + depth_l1, (1,))


def _reference(d, D, t, T):
    err_d = jnp.abs(d - t)
    mask_d = t > 0
    disp = jnp.sum(jnp.where(mask_d, err_d, 0.0)) / jnp.sum(mask_d)
    err_D = jnp.abs(D - T)
    mask_D = T > 0
    dep = jnp.sum(jnp.where(mask_D, err_D, 0.0)) / jnp.sum(mask_D)
    return disp + dep


if __name__ == "__main__":
    key = jax.random.PRNGKey(0)
    kl, kr, kd, kD, kt, kT = jax.random.split(key, 6)

    B, H, W = 2, 16, 16
    # left/right RGB images (unused by the loss, present for interface fidelity)
    l = jax.random.normal(kl, (B, 3, H, W), jnp.float32)
    r = jax.random.normal(kr, (B, 3, H, W), jnp.float32)
    # predicted disparity / depth and ground truths (single channel, NCHW)
    d = jax.random.uniform(kd, (B, 1, H, W), jnp.float32, 0.0, 10.0)
    D = jax.random.uniform(kD, (B, 1, H, W), jnp.float32, 0.0, 10.0)
    # ground truths: mix of valid (>0) and invalid (<=0) pixels
    t = jax.random.uniform(kt, (B, 1, H, W), jnp.float32, -2.0, 10.0)
    T = jax.random.uniform(kT, (B, 1, H, W), jnp.float32, -2.0, 10.0)

    loss = jax.block_until_ready(vdt_loss(l, r, d, D, t, T))
    ref = _reference(d, D, t, T)
    assert jnp.allclose(loss[0], ref, rtol=1e-5, atol=1e-5), (loss, ref)

    print("KERNEL_OK")
</pallas_src>

<mosaic_0001>
module attributes {stable_mosaic.version = 11 : i64} {
  func.func @_vdt_loss_kernel(%arg0: i32, %arg1: i32, %arg2: memref<8x128xf32, #tpu.memory_space<vmem>>, %arg3: memref<8x128xf32, #tpu.memory_space<vmem>>, %arg4: memref<8x128xf32, #tpu.memory_space<vmem>>, %arg5: memref<8x128xf32, #tpu.memory_space<vmem>>, %arg6: memref<1x4x8x128xf32, #tpu.memory_space<vmem>>) attributes {dimension_semantics = [#tpu.dimension_semantics<parallel>, #tpu.dimension_semantics<arbitrary>], iteration_bounds = array<i64: 1, 1>, scalar_prefetch = 0 : i64, scratch_operands = 0 : i64, tpu.core_type = #tpu.core_type<tc>, window_params = [{transform_indices = @transform_0, window_bounds = array<i64: 8, 128>}, {transform_indices = @transform_1, window_bounds = array<i64: 8, 128>}, {transform_indices = @transform_2, window_bounds = array<i64: 8, 128>}, {transform_indices = @transform_3, window_bounds = array<i64: 8, 128>}, {transform_indices = @transform_4, window_bounds = array<i64: 1, 4, 8, 128>}]} {
    %c1_i32 = arith.constant 1 : i32
    %0 = arith.muli %arg0, %c1_i32 : i32
    %1 = arith.addi %0, %arg1 : i32
    %c0_i32 = arith.constant 0 : i32
    %2 = arith.cmpi eq, %arg1, %c0_i32 : i32
    %3 = arith.extui %2 : i1 to i32
    %c0_i32_0 = arith.constant 0 : i32
    %4 = arith.cmpi ne, %3, %c0_i32_0 : i32
    scf.if %4 {
      %cst = arith.constant 0.000000e+00 : f32
      %27 = vector.broadcast %cst : f32 to vector<1x4x8x128xf32>
      %c0 = arith.constant 0 : index
      %c0_16 = arith.constant 0 : index
      %c0_17 = arith.constant 0 : index
      %c0_18 = arith.constant 0 : index
      %28 = vector.load %arg6[%c0, %c0_16, %c0_17, %c0_18] : memref<1x4x8x128xf32, #tpu.memory_space<vmem>>, vector<1x4x8x128xf32>
      tpu.vector_store %arg6[%c0, %c0_16, %c0_17, %c0_18], %27 {strides = array<i32>} : memref<1x4x8x128xf32, #tpu.memory_space<vmem>>, vector<1x4x8x128xf32>,
    } else {
    }
    %c8_i32 = arith.constant 8 : i32
    %5 = arith.muli %1, %c8_i32 : i32
    %c8_i32_1 = arith.constant 8 : i32
    %6 = arith.addi %5, %c8_i32_1 : i32
    %c8_i32_2 = arith.constant 8 : i32
    %7 = arith.cmpi sle, %6, %c8_i32_2 : i32
    %8 = arith.extui %7 : i1 to i32
    %c0_i32_3 = arith.constant 0 : i32
    %9 = arith.cmpi ne, %8, %c0_i32_3 : i32
    scf.if %9 {
      %cst = arith.constant 0.000000e+00 : f32
      %27 = vector.broadcast %cst : f32 to vector<8x128xf32>
      %cst_16 = arith.constant 0.000000e+00 : f32
      %28 = vector.broadcast %cst_16 : f32 to vector<8x128xf32>
      %c0_i32_17 = arith.constant 0 : i32
      %c8_i32_18 = arith.constant 8 : i32
      %29 = arith.muli %c0_i32_17, %c8_i32_18 : i32
      %30 = tpu.assume_multiple %29, 8 : i32
      %31 = arith.index_cast %30 : i32 to index
      %c0 = arith.constant 0 : index
      %32 = vector.load %arg2[%31, %c0] : memref<8x128xf32, #tpu.memory_space<vmem>>, vector<8x128xf32>
      %33 = arith.index_cast %30 : i32 to index
      %c0_19 = arith.constant 0 : index
      %34 = vector.load %arg3[%33, %c0_19] : memref<8x128xf32, #tpu.memory_space<vmem>>, vector<8x128xf32>
      %cst_20 = arith.constant 0.000000e+00 : f32
      %35 = vector.broadcast %cst_20 : f32 to vector<8x128xf32>
      %36 = arith.cmpf ogt, %34, %35 : vector<8x128xf32>
      %37 = arith.subf %32, %34 : vector<8x128xf32>
      %38 = math.absf %37 : vector<8x128xf32>
      %cst_21 = arith.constant 0.000000e+00 : f32
      %39 = vector.broadcast %cst_21 : f32 to vector<8x128xf32>
      %40 = arith.select %36, %38, %39 : vector<8x128xi1>, vector<8x128xf32>
      %41 = arith.extui %36 : vector<8x128xi1> to vector<8x128xi32>
      %42 = arith.sitofp %41 : vector<8x128xi32> to vector<8x128xf32>
      %43 = vector.shape_cast %40 : vector<8x128xf32> to vector<1x8x128xf32>
      %cst_22 = arith.constant dense<0.000000e+00> : vector<8x128xf32>
      %44 = vector.multi_reduction <add>, %43, %cst_22 [0] : vector<1x8x128xf32> to vector<8x128xf32>
      %45 = arith.addf %27, %44 : vector<8x128xf32>
      %46 = vector.shape_cast %42 : vector<8x128xf32> to vector<1x8x128xf32>
      %cst_23 = arith.constant dense<0.000000e+00> : vector<8x128xf32>
      %47 = vector.multi_reduction <add>, %46, %cst_23 [0] : vector<1x8x128xf32> to vector<8x128xf32>
      %48 = arith.addf %28, %47 : vector<8x128xf32>
      %c1_i32_24 = arith.constant 1 : i32
      %c0_25 = arith.constant 0 : index
      %c0_26 = arith.constant 0 : index
      %c0_27 = arith.constant 0 : index
      %c0_28 = arith.constant 0 : index
      %49 = vector.load %arg6[%c0_25, %c0_26, %c0_27, %c0_28] : memref<1x4x8x128xf32, #tpu.memory_space<vmem>>, vector<1x1x8x128xf32>
      %50 = vector.shape_cast %49 : vector<1x1x8x128xf32> to vector<8x128xf32>
      %51 = arith.addf %50, %45 : vector<8x128xf32>
      %c0_29 = arith.constant 0 : index
      %c0_30 = arith.constant 0 : index
      %c0_31 = arith.constant 0 : index
      %c0_32 = arith.constant 0 : index
      %52 = vector.load %arg6[%c0_29, %c0_30, %c0_31, %c0_32] : memref<1x4x8x128xf32, #tpu.memory_space<vmem>>, vector<1x1x8x128xf32>
      %53 = vector.shape_cast %52 : vector<1x1x8x128xf32> to vector<8x128xf32>
      %54 = vector.shape_cast %51 : vector<8x128xf32> to vector<1x1x8x128xf32>
      tpu.vector_store %arg6[%c0_29, %c0_30, %c0_31, %c0_32], %54 {strides = array<i32>} : memref<1x4x8x128xf32, #tpu.memory_space<vmem>>, vector<1x1x8x128xf32>,
      %c0_33 = arith.constant 0 : index
      %c1 = arith.constant 1 : index
      %c0_34 = arith.constant 0 : index
      %c0_35 = arith.constant 0 : index
      %55 = vector.load %arg6[%c0_33, %c1, %c0_34, %c0_35] : memref<1x4x8x128xf32, #tpu.memory_space<vmem>>, vector<1x1x8x128xf32>
      %56 = vector.shape_cast %55 : vector<1x1x8x128xf32> to vector<8x128xf32>
      %57 = arith.addf %56, %48 : vector<8x128xf32>
      %c0_36 = arith.constant 0 : index
      %c1_37 = arith.constant 1 : index
      %c0_38 = arith.constant 0 : index
      %c0_39 = arith.constant 0 : index
      %58 = vector.load %arg6[%c0_36, %c1_37, %c0_38, %c0_39] : memref<1x4x8x128xf32, #tpu.memory_space<vmem>>, vector<1x1x8x128xf32>
      %59 = vector.shape_cast %58 : vector<1x1x8x128xf32> to vector<8x128xf32>
      %60 = vector.shape_cast %57 : vector<8x128xf32> to vector<1x1x8x128xf32>
      tpu.vector_store %arg6[%c0_36, %c1_37, %c0_38, %c0_39], %60 {strides = array<i32>} : memref<1x4x8x128xf32, #tpu.memory_space<vmem>>, vector<1x1x8x128xf32>,
    } else {
    }
    %c1_i32_4 = arith.constant 1 : i32
    %10 = arith.cmpi slt, %1, %c1_i32_4 : i32
    %c8_i32_5 = arith.constant 8 : i32
    %11 = arith.addi %5, %c8_i32_5 : i32
    %c8_i32_6 = arith.constant 8 : i32
    %12 = arith.cmpi sgt, %11, %c8_i32_6 : i32
    %13 = arith.andi %10, %12 : i1
    %14 = arith.extui %13 : i1 to i32
    %c0_i32_7 = arith.constant 0 : i32
    %15 = arith.cmpi ne, %14, %c0_i32_7 : i32
    scf.if %15 {
      %c8_i32_16 = arith.constant 8 : i32
      %27 = arith.subi %c8_i32_16, %5 : i32
      %cst = arith.constant 0.000000e+00 : f32
      %28 = vector.broadcast %cst : f32 to vector<8x128xf32>
      %cst_17 = arith.constant 0.000000e+00 : f32
      %29 = vector.broadcast %cst_17 : f32 to vector<8x128xf32>
      %c0_i32_18 = arith.constant 0 : i32
      %c8_i32_19 = arith.constant 8 : i32
      %30 = arith.muli %c0_i32_18, %c8_i32_19 : i32
      %31 = tpu.assume_multiple %30, 8 : i32
      %32 = arith.index_cast %31 : i32 to index
      %c0 = arith.constant 0 : index
      %33 = vector.load %arg2[%32, %c0] : memref<8x128xf32, #tpu.memory_space<vmem>>, vector<8x128xf32>
      %34 = arith.index_cast %31 : i32 to index
      %c0_20 = arith.constant 0 : index
      %35 = vector.load %arg3[%34, %c0_20] : memref<8x128xf32, #tpu.memory_space<vmem>>, vector<8x128xf32>
      %cst_21 = arith.constant 0.000000e+00 : f32
      %36 = vector.broadcast %cst_21 : f32 to vector<8x128xf32>
      %37 = arith.cmpf ogt, %35, %36 : vector<8x128xf32>
      %38 = tpu.iota {dimensions = array<i32: 0>} : vector<8x128xi32>
      %39 = vector.broadcast %31 : i32 to vector<8x128xi32>
      %40 = arith.addi %38, %39 : vector<8x128xi32>
      %41 = vector.broadcast %27 : i32 to vector<8x128xi32>
      %42 = arith.cmpi slt, %40, %41 : vector<8x128xi32>
      %43 = arith.andi %37, %42 : vector<8x128xi1>
      %44 = arith.subf %33, %35 : vector<8x128xf32>
      %45 = math.absf %44 : vector<8x128xf32>
      %cst_22 = arith.constant 0.000000e+00 : f32
      %46 = vector.broadcast %cst_22 : f32 to vector<8x128xf32>
      %47 = arith.select %43, %45, %46 : vector<8x128xi1>, vector<8x128xf32>
      %48 = arith.extui %43 : vector<8x128xi1> to vector<8x128xi32>
      %49 = arith.sitofp %48 : vector<8x128xi32> to vector<8x128xf32>
      %50 = vector.shape_cast %47 : vector<8x128xf32> to vector<1x8x128xf32>
      %cst_23 = arith.constant dense<0.000000e+00> : vector<8x128xf32>
      %51 = vector.multi_reduction <add>, %50, %cst_23 [0] : vector<1x8x128xf32> to vector<8x128xf32>
      %52 = arith.addf %28, %51 : vector<8x128xf32>
      %53 = vector.shape_cast %49 : vector<8x128xf32> to vector<1x8x128xf32>
      %cst_24 = arith.constant dense<0.000000e+00> : vector<8x128xf32>
      %54 = vector.multi_reduction <add>, %53, %cst_24 [0] : vector<1x8x128xf32> to vector<8x128xf32>
      %55 = arith.addf %29, %54 : vector<8x128xf32>
      %c1_i32_25 = arith.constant 1 : i32
      %c0_26 = arith.constant 0 : index
      %c0_27 = arith.constant 0 : index
      %c0_28 = arith.constant 0 : index
      %c0_29 = arith.constant 0 : index
      %56 = vector.load %arg6[%c0_26, %c0_27, %c0_28, %c0_29] : memref<1x4x8x128xf32, #tpu.memory_space<vmem>>, vector<1x1x8x128xf32>
      %57 = vector.shape_cast %56 : vector<1x1x8x128xf32> to vector<8x128xf32>
      %58 = arith.addf %57, %52 : vector<8x128xf32>
      %c0_30 = arith.constant 0 : index
      %c0_31 = arith.constant 0 : index
      %c0_32 = arith.constant 0 : index
      %c0_33 = arith.constant 0 : index
      %59 = vector.load %arg6[%c0_30, %c0_31, %c0_32, %c0_33] : memref<1x4x8x128xf32, #tpu.memory_space<vmem>>, vector<1x1x8x128xf32>
      %60 = vector.shape_cast %59 : vector<1x1x8x128xf32> to vector<8x128xf32>
      %61 = vector.shape_cast %58 : vector<8x128xf32> to vector<1x1x8x128xf32>
      tpu.vector_store %arg6[%c0_30, %c0_31, %c0_32, %c0_33], %61 {strides = array<i32>} : memref<1x4x8x128xf32, #tpu.memory_space<vmem>>, vector<1x1x8x128xf32>,
      %c0_34 = arith.constant 0 : index
      %c1 = arith.constant 1 : index
      %c0_35 = arith.constant 0 : index
      %c0_36 = arith.constant 0 : index
      %62 = vector.load %arg6[%c0_34, %c1, %c0_35, %c0_36] : memref<1x4x8x128xf32, #tpu.memory_space<vmem>>, vector<1x1x8x128xf32>
      %63 = vector.shape_cast %62 : vector<1x1x8x128xf32> to vector<8x128xf32>
      %64 = arith.addf %63, %55 : vector<8x128xf32>
      %c0_37 = arith.constant 0 : index
      %c1_38 = arith.constant 1 : index
      %c0_39 = arith.constant 0 : index
      %c0_40 = arith.constant 0 : index
      %65 = vector.load %arg6[%c0_37, %c1_38, %c0_39, %c0_40] : memref<1x4x8x128xf32, #tpu.memory_space<vmem>>, vector<1x1x8x128xf32>
      %66 = vector.shape_cast %65 : vector<1x1x8x128xf32> to vector<8x128xf32>
      %67 = vector.shape_cast %64 : vector<8x128xf32> to vector<1x1x8x128xf32>
      tpu.vector_store %arg6[%c0_37, %c1_38, %c0_39, %c0_40], %67 {strides = array<i32>} : memref<1x4x8x128xf32, #tpu.memory_space<vmem>>, vector<1x1x8x128xf32>,
    } else {
    }
    %c8_i32_8 = arith.constant 8 : i32
    %16 = arith.muli %1, %c8_i32_8 : i32
    %c8_i32_9 = arith.constant 8 : i32
    %17 = arith.addi %16, %c8_i32_9 : i32
    %c8_i32_10 = arith.constant 8 : i32
    %18 = arith.cmpi sle, %17, %c8_i32_10 : i32
    %19 = arith.extui %18 : i1 to i32
    %c0_i32_11 = arith.constant 0 : i32
    %20 = arith.cmpi ne, %19, %c0_i32_11 : i32
    scf.if %20 {
      %cst = arith.constant 0.000000e+00 : f32
      %27 = vector.broadcast %cst : f32 to vector<8x128xf32>
      %cst_16 = arith.constant 0.000000e+00 : f32
      %28 = vector.broadcast %cst_16 : f32 to vector<8x128xf32>
      %c0_i32_17 = arith.constant 0 : i32
      %c8_i32_18 = arith.constant 8 : i32
      %29 = arith.muli %c0_i32_17, %c8_i32_18 : i32
      %30 = tpu.assume_multiple %29, 8 : i32
      %31 = arith.index_cast %30 : i32 to index
      %c0 = arith.constant 0 : index
      %32 = vector.load %arg4[%31, %c0] : memref<8x128xf32, #tpu.memory_space<vmem>>, vector<8x128xf32>
      %33 = arith.index_cast %30 : i32 to index
      %c0_19 = arith.constant 0 : index
      %34 = vector.load %arg5[%33, %c0_19] : memref<8x128xf32, #tpu.memory_space<vmem>>, vector<8x128xf32>
      %cst_20 = arith.constant 0.000000e+00 : f32
      %35 = vector.broadcast %cst_20 : f32 to vector<8x128xf32>
      %36 = arith.cmpf ogt, %34, %35 : vector<8x128xf32>
      %37 = arith.subf %32, %34 : vector<8x128xf32>
      %38 = math.absf %37 : vector<8x128xf32>
      %cst_21 = arith.constant 0.000000e+00 : f32
      %39 = vector.broadcast %cst_21 : f32 to vector<8x128xf32>
      %40 = arith.select %36, %38, %39 : vector<8x128xi1>, vector<8x128xf32>
      %41 = arith.extui %36 : vector<8x128xi1> to vector<8x128xi32>
      %42 = arith.sitofp %41 : vector<8x128xi32> to vector<8x128xf32>
      %43 = vector.shape_cast %40 : vector<8x128xf32> to vector<1x8x128xf32>
      %cst_22 = arith.constant dense<0.000000e+00> : vector<8x128xf32>
      %44 = vector.multi_reduction <add>, %43, %cst_22 [0] : vector<1x8x128xf32> to vector<8x128xf32>
      %45 = arith.addf %27, %44 : vector<8x128xf32>
      %46 = vector.shape_cast %42 : vector<8x128xf32> to vector<1x8x128xf32>
      %cst_23 = arith.constant dense<0.000000e+00> : vector<8x128xf32>
      %47 = vector.multi_reduction <add>, %46, %cst_23 [0] : vector<1x8x128xf32> to vector<8x128xf32>
      %48 = arith.addf %28, %47 : vector<8x128xf32>
      %c1_i32_24 = arith.constant 1 : i32
      %c0_25 = arith.constant 0 : index
      %c2 = arith.constant 2 : index
      %c0_26 = arith.constant 0 : index
      %c0_27 = arith.constant 0 : index
      %49 = vector.load %arg6[%c0_25, %c2, %c0_26, %c0_27] : memref<1x4x8x128xf32, #tpu.memory_space<vmem>>, vector<1x1x8x128xf32>
      %50 = vector.shape_cast %49 : vector<1x1x8x128xf32> to vector<8x128xf32>
      %51 = arith.addf %50, %45 : vector<8x128xf32>
      %c0_28 = arith.constant 0 : index
      %c2_29 = arith.constant 2 : index
      %c0_30 = arith.constant 0 : index
      %c0_31 = arith.constant 0 : index
      %52 = vector.load %arg6[%c0_28, %c2_29, %c0_30, %c0_31] : memref<1x4x8x128xf32, #tpu.memory_space<vmem>>, vector<1x1x8x128xf32>
      %53 = vector.shape_cast %52 : vector<1x1x8x128xf32> to vector<8x128xf32>
      %54 = vector.shape_cast %51 : vector<8x128xf32> to vector<1x1x8x128xf32>
      tpu.vector_store %arg6[%c0_28, %c2_29, %c0_30, %c0_31], %54 {strides = array<i32>} : memref<1x4x8x128xf32, #tpu.memory_space<vmem>>, vector<1x1x8x128xf32>,
      %c0_32 = arith.constant 0 : index
      %c3 = arith.constant 3 : index
      %c0_33 = arith.constant 0 : index
      %c0_34 = arith.constant 0 : index
      %55 = vector.load %arg6[%c0_32, %c3, %c0_33, %c0_34] : memref<1x4x8x128xf32, #tpu.memory_space<vmem>>, vector<1x1x8x128xf32>
      %56 = vector.shape_cast %55 : vector<1x1x8x128xf32> to vector<8x128xf32>
      %57 = arith.addf %56, %48 : vector<8x128xf32>
      %c0_35 = arith.constant 0 : index
      %c3_36 = arith.constant 3 : index
      %c0_37 = arith.constant 0 : index
      %c0_38 = arith.constant 0 : index
      %58 = vector.load %arg6[%c0_35, %c3_36, %c0_37, %c0_38] : memref<1x4x8x128xf32, #tpu.memory_space<vmem>>, vector<1x1x8x128xf32>
      %59 = vector.shape_cast %58 : vector<1x1x8x128xf32> to vector<8x128xf32>
      %60 = vector.shape_cast %57 : vector<8x128xf32> to vector<1x1x8x128xf32>
      tpu.vector_store %arg6[%c0_35, %c3_36, %c0_37, %c0_38], %60 {strides = array<i32>} : memref<1x4x8x128xf32, #tpu.memory_space<vmem>>, vector<1x1x8x128xf32>,
    } else {
    }
    %c1_i32_12 = arith.constant 1 : i32
    %21 = arith.cmpi slt, %1, %c1_i32_12 : i32
    %c8_i32_13 = arith.constant 8 : i32
    %22 = arith.addi %16, %c8_i32_13 : i32
    %c8_i32_14 = arith.constant 8 : i32
    %23 = arith.cmpi sgt, %22, %c8_i32_14 : i32
    %24 = arith.andi %21, %23 : i1
    %25 = arith.extui %24 : i1 to i32
    %c0_i32_15 = arith.constant 0 : i32
    %26 = arith.cmpi ne, %25, %c0_i32_15 : i32
    scf.if %26 {
      %c8_i32_16 = arith.constant 8 : i32
      %27 = arith.subi %c8_i32_16, %16 : i32
      %cst = arith.constant 0.000000e+00 : f32
      %28 = vector.broadcast %cst : f32 to vector<8x128xf32>
      %cst_17 = arith.constant 0.000000e+00 : f32
      %29 = vector.broadcast %cst_17 : f32 to vector<8x128xf32>
      %c0_i32_18 = arith.constant 0 : i32
      %c8_i32_19 = arith.constant 8 : i32
      %30 = arith.muli %c0_i32_18, %c8_i32_19 : i32
      %31 = tpu.assume_multiple %30, 8 : i32
      %32 = arith.index_cast %31 : i32 to index
      %c0 = arith.constant 0 : index
      %33 = vector.load %arg4[%32, %c0] : memref<8x128xf32, #tpu.memory_space<vmem>>, vector<8x128xf32>
      %34 = arith.index_cast %31 : i32 to index
      %c0_20 = arith.constant 0 : index
      %35 = vector.load %arg5[%34, %c0_20] : memref<8x128xf32, #tpu.memory_space<vmem>>, vector<8x128xf32>
      %cst_21 = arith.constant 0.000000e+00 : f32
      %36 = vector.broadcast %cst_21 : f32 to vector<8x128xf32>
      %37 = arith.cmpf ogt, %35, %36 : vector<8x128xf32>
      %38 = tpu.iota {dimensions = array<i32: 0>} : vector<8x128xi32>
      %39 = vector.broadcast %31 : i32 to vector<8x128xi32>
      %40 = arith.addi %38, %39 : vector<8x128xi32>
      %41 = vector.broadcast %27 : i32 to vector<8x128xi32>
      %42 = arith.cmpi slt, %40, %41 : vector<8x128xi32>
      %43 = arith.andi %37, %42 : vector<8x128xi1>
      %44 = arith.subf %33, %35 : vector<8x128xf32>
      %45 = math.absf %44 : vector<8x128xf32>
      %cst_22 = arith.constant 0.000000e+00 : f32
      %46 = vector.broadcast %cst_22 : f32 to vector<8x128xf32>
      %47 = arith.select %43, %45, %46 : vector<8x128xi1>, vector<8x128xf32>
      %48 = arith.extui %43 : vector<8x128xi1> to vector<8x128xi32>
      %49 = arith.sitofp %48 : vector<8x128xi32> to vector<8x128xf32>
      %50 = vector.shape_cast %47 : vector<8x128xf32> to vector<1x8x128xf32>
      %cst_23 = arith.constant dense<0.000000e+00> : vector<8x128xf32>
      %51 = vector.multi_reduction <add>, %50, %cst_23 [0] : vector<1x8x128xf32> to vector<8x128xf32>
      %52 = arith.addf %28, %51 : vector<8x128xf32>
      %53 = vector.shape_cast %49 : vector<8x128xf32> to vector<1x8x128xf32>
      %cst_24 = arith.constant dense<0.000000e+00> : vector<8x128xf32>
      %54 = vector.multi_reduction <add>, %53, %cst_24 [0] : vector<1x8x128xf32> to vector<8x128xf32>
      %55 = arith.addf %29, %54 : vector<8x128xf32>
      %c1_i32_25 = arith.constant 1 : i32
      %c0_26 = arith.constant 0 : index
      %c2 = arith.constant 2 : index
      %c0_27 = arith.constant 0 : index
      %c0_28 = arith.constant 0 : index
      %56 = vector.load %arg6[%c0_26, %c2, %c0_27, %c0_28] : memref<1x4x8x128xf32, #tpu.memory_space<vmem>>, vector<1x1x8x128xf32>
      %57 = vector.shape_cast %56 : vector<1x1x8x128xf32> to vector<8x128xf32>
      %58 = arith.addf %57, %52 : vector<8x128xf32>
      %c0_29 = arith.constant 0 : index
      %c2_30 = arith.constant 2 : index
      %c0_31 = arith.constant 0 : index
      %c0_32 = arith.constant 0 : index
      %59 = vector.load %arg6[%c0_29, %c2_30, %c0_31, %c0_32] : memref<1x4x8x128xf32, #tpu.memory_space<vmem>>, vector<1x1x8x128xf32>
      %60 = vector.shape_cast %59 : vector<1x1x8x128xf32> to vector<8x128xf32>
      %61 = vector.shape_cast %58 : vector<8x128xf32> to vector<1x1x8x128xf32>
      tpu.vector_store %arg6[%c0_29, %c2_30, %c0_31, %c0_32], %61 {strides = array<i32>} : memref<1x4x8x128xf32, #tpu.memory_space<vmem>>, vector<1x1x8x128xf32>,
      %c0_33 = arith.constant 0 : index
      %c3 = arith.constant 3 : index
      %c0_34 = arith.constant 0 : index
      %c0_35 = arith.constant 0 : index
      %62 = vector.load %arg6[%c0_33, %c3, %c0_34, %c0_35] : memref<1x4x8x128xf32, #tpu.memory_space<vmem>>, vector<1x1x8x128xf32>
      %63 = vector.shape_cast %62 : vector<1x1x8x128xf32> to vector<8x128xf32>
      %64 = arith.addf %63, %55 : vector<8x128xf32>
      %c0_36 = arith.constant 0 : index
      %c3_37 = arith.constant 3 : index
      %c0_38 = arith.constant 0 : index
      %c0_39 = arith.constant 0 : index
      %65 = vector.load %arg6[%c0_36, %c3_37, %c0_38, %c0_39] : memref<1x4x8x128xf32, #tpu.memory_space<vmem>>, vector<1x1x8x128xf32>
      %66 = vector.shape_cast %65 : vector<1x1x8x128xf32> to vector<8x128xf32>
      %67 = vector.shape_cast %64 : vector<8x128xf32> to vector<1x1x8x128xf32>
      tpu.vector_store %arg6[%c0_36, %c3_37, %c0_38, %c0_39], %67 {strides = array<i32>} : memref<1x4x8x128xf32, #tpu.memory_space<vmem>>, vector<1x1x8x128xf32>,
    } else {
    }
    return
  }
  func.func @transform_0(%arg0: i32, %arg1: i32) -> (i32, i32) {
    %c1_i32 = arith.constant 1 : i32
    %0 = arith.muli %arg0, %c1_i32 : i32
    %1 = arith.addi %0, %arg1 : i32
    %c0_i32 = arith.constant 0 : i32
    %2 = arith.minsi %1, %c0_i32 : i32
    %c0_i32_0 = arith.constant 0 : i32
    %c0_i32_1 = arith.constant 0 : i32
    return %2, %c0_i32_0 : i32, i32
  }
  func.func @transform_1(%arg0: i32, %arg1: i32) -> (i32, i32) {
    %c1_i32 = arith.constant 1 : i32
    %0 = arith.muli %arg0, %c1_i32 : i32
    %1 = arith.addi %0, %arg1 : i32
    %c0_i32 = arith.constant 0 : i32
    %2 = arith.minsi %1, %c0_i32 : i32
    %c0_i32_0 = arith.constant 0 : i32
    %c0_i32_1 = arith.constant 0 : i32
    return %2, %c0_i32_0 : i32, i32
  }
  func.func @transform_2(%arg0: i32, %arg1: i32) -> (i32, i32) {
    %c1_i32 = arith.constant 1 : i32
    %0 = arith.muli %arg0, %c1_i32 : i32
    %1 = arith.addi %0, %arg1 : i32
    %c0_i32 = arith.constant 0 : i32
    %2 = arith.minsi %1, %c0_i32 : i32
    %c0_i32_0 = arith.constant 0 : i32
    %c0_i32_1 = arith.constant 0 : i32
    return %2, %c0_i32_0 : i32, i32
  }
  func.func @transform_3(%arg0: i32, %arg1: i32) -> (i32, i32) {
    %c1_i32 = arith.constant 1 : i32
    %0 = arith.muli %arg0, %c1_i32 : i32
    %1 = arith.addi %0, %arg1 : i32
    %c0_i32 = arith.constant 0 : i32
    %2 = arith.minsi %1, %c0_i32 : i32
    %c0_i32_0 = arith.constant 0 : i32
    %c0_i32_1 = arith.constant 0 : i32
    return %2, %c0_i32_0 : i32, i32
  }
  func.func @transform_4(%arg0: i32, %arg1: i32) -> (i32, i32, i32, i32) {
    %c0_i32 = arith.constant 0 : i32
    %c0_i32_0 = arith.constant 0 : i32
    %c0_i32_1 = arith.constant 0 : i32
    %c0_i32_2 = arith.constant 0 : i32
    return %arg0, %c0_i32, %c0_i32_0, %c0_i32_1 : i32, i32, i32, i32
  }
}

</mosaic_0001>

<llo_original>
// kernel: vdt_loss.1
$region0: #{vdt_loss.1}
  #allocation0 [shape = 'u32[]', space=smem, size = 0x4, offset = 0x4, fixed_abs, tag = 'smem constant byte address 0x4 - core index']
  #allocation1 [shape = 'u32[144,128]{1,0:T(1,128)}', space=vmem, size = 0x12000, scoped, tag = 'internal scratch']
  %s0 = inlined_call_operand.vmem [shape: f32[8,128], index: 0, kind: input, shape index: {}]
  %s1 = inlined_call_operand.vmem [shape: f32[8,128], index: 1, kind: input, shape index: {}]
  %s2 = inlined_call_operand.vmem [shape: f32[8,128], index: 2, kind: input, shape index: {}]
  %s3 = inlined_call_operand.vmem [shape: f32[8,128], index: 3, kind: input, shape index: {}]
  %s4 = inlined_call_operand.vmem [shape: f32[1,4,8,128], index: 4, kind: output, shape index: {}]
  %s5 = sld [smem:[#allocation0]]
  $region46: #{vdt_loss.1} parent=0
    _
  %s7 = ssub.s32 1, %s5
  %s8 = scalar_select 0, %s7, %s5
  // Predicated region
  $region2: #{vdt_loss.1} parent=0 // pred_check
    _
  $region3: #{vdt_loss.1} parent=0 // pred_check_branch
    %10 = sbr.rel (0) target = $region5
  $region4: #{vdt_loss.1} parent=0 // pred_region
    %s11 = sadd.s32 0, 0
    %p12 = scmp.lt.s32.totalorder %s11, 0
    %s13 = scalar_select %p12, %s11, 0
    %p14 = scmp.lt.s32.totalorder %s13, 0
    %s15 = scalar_select %p14, %s13, 0
    %s16 = smul.addr %s15, 8
    %s17 = scalar_lea.vmem %s0, %s16
    %s18 = sadd.s32 0, 0
    %p19 = scmp.lt.s32.totalorder %s18, 0
    %s20 = scalar_select %p19, %s18, 0
  $region5: #{vdt_loss.1} parent=0 // pred_fallthru
    _
  // Predicated region
  $region6: #{vdt_loss.1} parent=0 // pred_check
    _
  $region7: #{vdt_loss.1} parent=0 // pred_check_branch
    %22 = sbr.rel (0) target = $region9
  $region8: #{vdt_loss.1} parent=0 // pred_region
    %s23 = sadd.s32 0, 0
    %p24 = scmp.lt.s32.totalorder %s23, 0
    %s25 = scalar_select %p24, %s23, 0
    %p26 = scmp.lt.s32.totalorder %s25, 0
    %s27 = scalar_select %p26, %s25, 0
    %s28 = smul.addr %s27, 8
    %s29 = scalar_lea.vmem %s1, %s28
    %s30 = sadd.s32 0, 0
    %p31 = scmp.lt.s32.totalorder %s30, 0
    %s32 = scalar_select %p31, %s30, 0
  $region9: #{vdt_loss.1} parent=0 // pred_fallthru
    _
  // Predicated region
  $region10: #{vdt_loss.1} parent=0 // pred_check
    _
  $region11: #{vdt_loss.1} parent=0 // pred_check_branch
    %34 = sbr.rel (0) target = $region13
  $region12: #{vdt_loss.1} parent=0 // pred_region
    %s35 = sadd.s32 0, 0
    %p36 = scmp.lt.s32.totalorder %s35, 0
    %s37 = scalar_select %p36, %s35, 0
    %p38 = scmp.lt.s32.totalorder %s37, 0
    %s39 = scalar_select %p38, %s37, 0
    %s40 = smul.addr %s39, 8
    %s41 = scalar_lea.vmem %s2, %s40
    %s42 = sadd.s32 0, 0
    %p43 = scmp.lt.s32.totalorder %s42, 0
    %s44 = scalar_select %p43, %s42, 0
  $region13: #{vdt_loss.1} parent=0 // pred_fallthru
    _
  // Predicated region
  $region14: #{vdt_loss.1} parent=0 // pred_check
    _
  $region15: #{vdt_loss.1} parent=0 // pred_check_branch
    %46 = sbr.rel (0) target = $region17
  $region16: #{vdt_loss.1} parent=0 // pred_region
    %s47 = sadd.s32 0, 0
    %p48 = scmp.lt.s32.totalorder %s47, 0
    %s49 = scalar_select %p48, %s47, 0
    %p50 = scmp.lt.s32.totalorder %s49, 0
    %s51 = scalar_select %p50, %s49, 0
    %s52 = smul.addr %s51, 8
    %s53 = scalar_lea.vmem %s3, %s52
    %s54 = sadd.s32 0, 0
    %p55 = scmp.lt.s32.totalorder %s54, 0
    %s56 = scalar_select %p55, %s54, 0
  $region17: #{vdt_loss.1} parent=0 // pred_fallthru
    _
  %s57 = sadd.s32 0, 0
  %p58 = scmp.lt.s32.totalorder %s57, 0
  %s59 = scalar_select %p58, %s57, 0
  %p60 = scmp.lt.s32.totalorder %s59, 0
  %s61 = scalar_select %p60, %s59, 0
  %s62 = smul.addr %s61, 8
  %s63 = scalar_lea.vmem %s0, %s62
  %s64 = sadd.s32 0, 0
  %p65 = scmp.lt.s32.totalorder %s64, 0
  %s66 = scalar_select %p65, %s64, 0
  %p67 = scmp.lt.s32.totalorder %s66, 0
  %s68 = scalar_select %p67, %s66, 0
  %s69 = smul.addr %s68, 8
  %s70 = scalar_lea.vmem %s1, %s69
  %s71 = sadd.s32 0, 0
  %p72 = scmp.lt.s32.totalorder %s71, 0
  %s73 = scalar_select %p72, %s71, 0
  %p74 = scmp.lt.s32.totalorder %s73, 0
  %s75 = scalar_select %p74, %s73, 0
  %s76 = smul.addr %s75, 8
  %s77 = scalar_lea.vmem %s2, %s76
  %s78 = sadd.s32 0, 0
  %p79 = scmp.lt.s32.totalorder %s78, 0
  %s80 = scalar_select %p79, %s78, 0
  %p81 = scmp.lt.s32.totalorder %s80, 0
  %s82 = scalar_select %p81, %s80, 0
  %s83 = smul.addr %s82, 8
  %s84 = scalar_lea.vmem %s3, %s83
  %s85 = sadd.s32 0, 0
  %p86 = scmp.lt.s32.totalorder %s85, 0
  %s87 = scalar_select %p86, %s85, 0
  %p88 = scmp.lt.s32.totalorder %s87, 0
  %s89 = scalar_select %p88, %s87, 0
  %s90 = smul.addr %s89, 8
  %s91 = scalar_lea.vmem %s0, %s90
  %s92 = sadd.s32 0, 0
  %p93 = scmp.lt.s32.totalorder %s92, 0
  %s94 = scalar_select %p93, %s92, 0
  %s95 = sadd.s32 0, 0
  %p96 = scmp.lt.s32.totalorder %s95, 0
  %s97 = scalar_select %p96, %s95, 0
  %p98 = scmp.lt.s32.totalorder %s97, 0
  %s99 = scalar_select %p98, %s97, 0
  %s100 = smul.addr %s99, 8
  %s101 = scalar_lea.vmem %s1, %s100
  %s102 = sadd.s32 0, 0
  %p103 = scmp.lt.s32.totalorder %s102, 0
  %s104 = scalar_select %p103, %s102, 0
  %s105 = sadd.s32 0, 0
  %p106 = scmp.lt.s32.totalorder %s105, 0
  %s107 = scalar_select %p106, %s105, 0
  %p108 = scmp.lt.s32.totalorder %s107, 0
  %s109 = scalar_select %p108, %s107, 0
  %s110 = smul.addr %s109, 8
  %s111 = scalar_lea.vmem %s2, %s110
  %s112 = sadd.s32 0, 0
  %p113 = scmp.lt.s32.totalorder %s112, 0
  %s114 = scalar_select %p113, %s112, 0
  %s115 = sadd.s32 0, 0
  %p116 = scmp.lt.s32.totalorder %s115, 0
  %s117 = scalar_select %p116, %s115, 0
  %p118 = scmp.lt.s32.totalorder %s117, 0
  %s119 = scalar_select %p118, %s117, 0
  %s120 = smul.addr %s119, 8
  %s121 = scalar_lea.vmem %s3, %s120
  %s122 = sadd.s32 0, 0
  %p123 = scmp.lt.s32.totalorder %s122, 0
  %s124 = scalar_select %p123, %s122, 0
  %s125 = sadd.s32 0, 0
  %p126 = scmp.eq.s32.totalorder 0, 0
  // Predicated region
  $region18: #{vdt_loss.1} parent=0 // pred_check
    %p127 = pneg %p126
  $region19: #{vdt_loss.1} parent=0 // pred_check_branch
    %129 = sbr.rel (%p127) target = $region21
  $region20: #{vdt_loss.1} parent=0 // pred_region
    %130 = vst [vmem:[%s4] sm:$0xff] 0.0
    %131 = vst [vmem:[%s4 + $0x8] sm:$0xff] 0.0
    %132 = vst [vmem:[%s4 + $0x10] sm:$0xff] 0.0
    %133 = vst [vmem:[%s4 + $0x18] sm:$0xff] 0.0
  $region21: #{vdt_loss.1} parent=0 // pred_fallthru
    _
  %s134 = smul.u32 %s125, 8
  %s135 = sadd.s32 %s134, 8
  %p136 = scmp.le.s32.totalorder %s135, 8
  // Predicated region
  $region22: #{vdt_loss.1} parent=0 // pred_check
    %p137 = pneg %p136
  $region23: #{vdt_loss.1} parent=0 // pred_check_branch
    %139 = sbr.rel (%p137) target = $region25
  $region24: #{vdt_loss.1} parent=0 // pred_region
    %v140 = vld [vmem:[%s91] sm:$0xff]
    %v141 = vld [vmem:[%s101] sm:$0xff]
    %vm142 = vcmp.gt.f32.partialorder %v141, 0.0
    %v143 = vsub.f32 %v140, %v141
    %v144 = vand.u32 2147483647, %v143
    %v145 = vsel %vm142, %v144, 0.0
    %v146 = vsel %vm142, 1, 0
    %v147 = vcvt.s32.f32 %v146
    %v148 = vadd.f32 %v145, 0.0
    %v149 = vadd.f32 %v148, 0.0
    %v150 = vadd.f32 %v147, 0.0
    %v151 = vadd.f32 %v150, 0.0
    %v152 = vld [vmem:[%s4] sm:$0xff]
    %v153 = vadd.f32 %v152, %v149
    %154 = vst [vmem:[%s4] sm:$0xff] %v153
    %s155 = scalar_lea.vmem %s4, 8
    %v156 = vld [vmem:[%s155] sm:$0xff]
    %v157 = vadd.f32 %v156, %v151
    %158 = vst [vmem:[%s155] sm:$0xff] %v157
  $region25: #{vdt_loss.1} parent=0 // pred_fallthru
    _
  %p159 = scmp.lt.s32.totalorder %s125, 1
  %p160 = scmp.gt.s32.totalorder %s135, 8
  %p161 = pnand %p159, %p160
  %p162 = pneg %p161
  // Predicated region
  $region26: #{vdt_loss.1} parent=0 // pred_check
    _
  $region27: #{vdt_loss.1} parent=0 // pred_check_branch
    %164 = sbr.rel (%p161) target = $region29
  $region28: #{vdt_loss.1} parent=0 // pred_region
    %s165 = ssub.s32 8, %s134
    %v166 = vld [vmem:[%s91] sm:$0xff]
    %v167 = vld [vmem:[%s101] sm:$0xff]
    %vm168 = vcmp.gt.f32.partialorder %v167, 0.0
    %v169 = vlaneseq
    %v170 = vshrl.u32 %v169, 7
    %v171 = vstv 0
    %v172 = vadd.s32 %v170, %v171
    %v173 = vstv %s165
    %vm174 = vcmp.lt.s32.totalorder %v172, %v173
    %vm175 = vmand %vm168, %vm174
    %v176 = vsub.f32 %v166, %v167
    %v177 = vand.u32 2147483647, %v176
    %v178 = vsel %vm175, %v177, 0.0
    %v179 = vsel %vm175, 1, 0
    %v180 = vcvt.s32.f32 %v179
    %v181 = vadd.f32 %v178, 0.0
    %v182 = vadd.f32 %v181, 0.0
    %v183 = vadd.f32 %v180, 0.0
    %v184 = vadd.f32 %v183, 0.0
    %v185 = vld [vmem:[%s4] sm:$0xff]
    %v186 = vadd.f32 %v185, %v182
    %187 = vst [vmem:[%s4] sm:$0xff] %v186
    %s188 = scalar_lea.vmem %s4, 8
    %v189 = vld [vmem:[%s188] sm:$0xff]
    %v190 = vadd.f32 %v189, %v184
    %191 = vst [vmem:[%s188] sm:$0xff] %v190
  $region29: #{vdt_loss.1} parent=0 // pred_fallthru
    _
  // Predicated region
  $region30: #{vdt_loss.1} parent=0 // pred_check
    %p192 = pneg %p136
  $region31: #{vdt_loss.1} parent=0 // pred_check_branch
    %194 = sbr.rel (%p192) target = $region33
  $region32: #{vdt_loss.1} parent=0 // pred_region
    %v195 = vld [vmem:[%s111] sm:$0xff]
    %v196 = vld [vmem:[%s121] sm:$0xff]
    %vm197 = vcmp.gt.f32.partialorder %v196, 0.0
    %v198 = vsub.f32 %v195, %v196
    %v199 = vand.u32 2147483647, %v198
    %v200 = vsel %vm197, %v199, 0.0
    %v201 = vsel %vm197, 1, 0
    %v202 = vcvt.s32.f32 %v201
    %v203 = vadd.f32 %v200, 0.0
    %v204 = vadd.f32 %v203, 0.0
    %v205 = vadd.f32 %v202, 0.0
    %v206 = vadd.f32 %v205, 0.0
    %s207 = scalar_lea.vmem %s4, 16
    %v208 = vld [vmem:[%s207] sm:$0xff]
    %v209 = vadd.f32 %v208, %v204
    %210 = vst [vmem:[%s207] sm:$0xff] %v209
    %s211 = scalar_lea.vmem %s4, 24
    %v212 = vld [vmem:[%s211] sm:$0xff]
    %v213 = vadd.f32 %v212, %v206
    %214 = vst [vmem:[%s211] sm:$0xff] %v213
  $region33: #{vdt_loss.1} parent=0 // pred_fallthru
    _
  // Predicated region
  $region34: #{vdt_loss.1} parent=0 // pred_check
    _
  $region35: #{vdt_loss.1} parent=0 // pred_check_branch
    %216 = sbr.rel (%p161) target = $region37
  $region36: #{vdt_loss.1} parent=0 // pred_region
    %s217 = ssub.s32 8, %s134
    %v218 = vld [vmem:[%s111] sm:$0xff]
    %v219 = vld [vmem:[%s121] sm:$0xff]
    %vm220 = vcmp.gt.f32.partialorder %v219, 0.0
    %v221 = vlaneseq
    %v222 = vshrl.u32 %v221, 7
    %v223 = vstv 0
    %v224 = vadd.s32 %v222, %v223
    %v225 = vstv %s217
    %vm226 = vcmp.lt.s32.totalorder %v224, %v225
    %vm227 = vmand %vm220, %vm226
    %v228 = vsub.f32 %v218, %v219
    %v229 = vand.u32 2147483647, %v228
    %v230 = vsel %vm227, %v229, 0.0
    %v231 = vsel %vm227, 1, 0
    %v232 = vcvt.s32.f32 %v231
    %v233 = vadd.f32 %v230, 0.0
    %v234 = vadd.f32 %v233, 0.0
    %v235 = vadd.f32 %v232, 0.0
    %v236 = vadd.f32 %v235, 0.0
    %s237 = scalar_lea.vmem %s4, 16
    %v238 = vld [vmem:[%s237] sm:$0xff]
    %v239 = vadd.f32 %v238, %v234
    %240 = vst [vmem:[%s237] sm:$0xff] %v239
    %s241 = scalar_lea.vmem %s4, 24
    %v242 = vld [vmem:[%s241] sm:$0xff]
    %v243 = vadd.f32 %v242, %v236
    %244 = vst [vmem:[%s241] sm:$0xff] %v243
  $region37: #{vdt_loss.1} parent=0 // pred_fallthru
    _
  // Predicated region
  $region38: #{vdt_loss.1} parent=0 // pred_check
    _
  $region39: #{vdt_loss.1} parent=0 // pred_check_branch
    %246 = sbr.rel (0) target = $region41
  $region40: #{vdt_loss.1} parent=0 // pred_region
    _
  $region41: #{vdt_loss.1} parent=0 // pred_fallthru
    _
  // Predicated region
  $region42: #{vdt_loss.1} parent=0 // pred_check
    _
  $region43: #{vdt_loss.1} parent=0 // pred_check_branch
    %248 = sbr.rel (0) target = $region45
  $region44: #{vdt_loss.1} parent=0 // pred_region
    _
  $region45: #{vdt_loss.1} parent=0 // pred_fallthru
    _

</llo_original>
